<compile_context>
chip_gen: v5e
topology: v5e:2x2
jax: 0.10.0
libtpu: 0.0.40
codegen_flags: <defaults>
</compile_context>

<pallas_src>
import math

import jax
import jax.numpy as jnp
from jax.experimental import pallas as pl
from jax.experimental.pallas import tpu as pltpu


def _pe_kernel(pos_ref, expand_ref, div_ref, phase_ref, out_ref):
    # pos_ref:    (TN, k)    f32  - k positions folded per output row
    # expand_ref: (k, k*H)   f32  - 0/1 matrix repeating each position H times
    # div_ref:    (1, k*H)   f32  - per-lane divisor exp(h * -ln(1e4)/H), tiled
    # phase_ref:  (1, k*H)   f32  - (h % 2) * pi/2, tiled
    # out_ref:    (TN, k*H)
    pos_rep = jnp.dot(pos_ref[...], expand_ref[...],
                      preferred_element_type=jnp.float32)       # MXU (idle otherwise)
    angle = pos_rep * div_ref[...] + phase_ref[...]             # VPU mul+add
    out_ref[...] = jnp.sin(angle).astype(out_ref.dtype)         # single EUP transcendental
    # TODO(synk): nn.Dropout is identity at inference; training-mode dropout
    # (pltpu.prng_* + mask/scale) intentionally not applied here.


class PositionalEncodingPallas:
    def __init__(self, time_encoding_size: int, dropout: float = 0.0,
                 out_dtype=jnp.float32):
        H = time_encoding_size
        self.hidden_size = H
        self.dropout = dropout            # unused at inference
        # out_dtype=jnp.bfloat16 halves HBM writeback if consumers accept it;
        # default float32 preserves the PyTorch module's output dtype.
        self.out_dtype = out_dtype

        # Lane-folding factor: pack k positions per output row so the last
        # (lane) dim is ~128 wide -> unmasked vector stores even for small H.
        k = max(1, 128 // H)
        self.k = k

        col = jnp.arange(H, dtype=jnp.float32)
        div = jnp.exp(col * (-math.log(10000.0) / H))                    # (H,)
        phase = (jnp.arange(H) % 2).astype(jnp.float32) * (math.pi / 2)  # (H,)
        self.div_tiled = jnp.tile(div, (k,)).reshape(1, k * H)
        self.phase_tiled = jnp.tile(phase, (k,)).reshape(1, k * H)
        # expand[j, j*H:(j+1)*H] = 1 : repeats position j across its H lanes.
        self.expand = jnp.repeat(jnp.eye(k, dtype=jnp.float32), H, axis=1)

    def __call__(self, position: jax.Array) -> jax.Array:
        orig_shape = position.shape
        H, k = self.hidden_size, self.k
        W = k * H

        pos = position.astype(jnp.float32).reshape(-1)
        N = pos.shape[0]
        n_rows = -(-N // k)                       # ceil(N / k) folded rows
        pad = n_rows * k - N
        if pad:
            pos = jnp.pad(pos, (0, pad))
        pos2d = pos.reshape(n_rows, k)

        # Row tile: ~4 MiB output block, multiple of 8 sublanes, capped at
        # 2048 rows; full-extent block if the whole array fits in one tile.
        tn = min(2048, max(8, ((4 << 20) // (W * 4)) // 8 * 8))
        if n_rows <= tn:
            tn = n_rows                           # full-extent block is always legal

        out = pl.pallas_call(
            _pe_kernel,
            out_shape=jax.ShapeDtypeStruct((n_rows, W), self.out_dtype),
            grid=(pl.cdiv(n_rows, tn),),
            in_specs=[
                pl.BlockSpec((tn, k), lambda i: (i, 0)),   # positions (row-tiled)
                pl.BlockSpec((k, W), lambda i: (0, 0)),    # expand matrix (resident)
                pl.BlockSpec((1, W), lambda i: (0, 0)),    # div (resident)
                pl.BlockSpec((1, W), lambda i: (0, 0)),    # phase (resident)
            ],
            out_specs=pl.BlockSpec((tn, W), lambda i: (i, 0)),
            compiler_params=pltpu.CompilerParams(
                dimension_semantics=("parallel",),          # megacore-shardable
                vmem_limit_bytes=32 * 1024 * 1024,
            ),
        )(pos2d, self.expand, self.div_tiled, self.phase_tiled)

        # Unfold the k lane-packed positions back to (N, H); layout plumbing
        # handled by XLA outside the kernel.
        out = out.reshape(n_rows * k, H)
        if pad:
            out = out[:N]
        return out.reshape(*orig_shape, H)


def _reference(position, hidden_size):
    # Pure-JAX reference mirroring the PyTorch module exactly.
    pos = position.astype(jnp.float32)[..., None]
    even = jnp.exp(jnp.arange(0, hidden_size, 2, dtype=jnp.float32)
                   * (-math.log(10000.0) / hidden_size))
    odd = jnp.exp(jnp.arange(1, hidden_size, 2, dtype=jnp.float32)
                  * (-math.log(10000.0) / hidden_size))
    pe = jnp.zeros((*position.shape, hidden_size), jnp.float32)
    pe = pe.at[..., 0::2].set(jnp.sin(pos * even))
    pe = pe.at[..., 1::2].set(jnp.cos(pos * odd))
    return pe


if __name__ == "__main__":
    key = jax.random.PRNGKey(0)
    batch, seq, hidden = 2, 8, 32
    # positions: arbitrary (e.g. timestamps) — deterministic random floats
    position = jax.random.uniform(key, (batch, seq), jnp.float32) * 100.0

    module = PositionalEncodingPallas(time_encoding_size=hidden, dropout=0.1)
    out = module(position)
    out = jax.block_until_ready(out)

    ref = _reference(position, hidden)
    assert out.shape == (batch, seq, hidden), out.shape
    # cos(x) is computed as sin(x + pi/2); allow a few f32 ulps of slack for
    # the rounded phase addition at |angle| up to ~100.
    assert jnp.allclose(out, ref, atol=2e-5, rtol=2e-5), "mismatch vs reference"

    print("KERNEL_OK")
</pallas_src>

<mosaic_0001>
module attributes {stable_mosaic.version = 11 : i64} {
  func.func @_pe_kernel(%arg0: i32, %arg1: memref<4x4xf32, #tpu.memory_space<vmem>>, %arg2: memref<4x128xf32, #tpu.memory_space<vmem>>, %arg3: memref<1x128xf32, #tpu.memory_space<vmem>>, %arg4: memref<1x128xf32, #tpu.memory_space<vmem>>, %arg5: memref<4x128xf32, #tpu.memory_space<vmem>>) attributes {dimension_semantics = [#tpu.dimension_semantics<parallel>], iteration_bounds = array<i64: 1>, scalar_prefetch = 0 : i64, scratch_operands = 0 : i64, tpu.core_type = #tpu.core_type<tc>, window_params = [{transform_indices = @transform_0, window_bounds = array<i64: 4, 4>}, {pipeline_mode = #tpu.pipeline_mode<synchronous>, transform_indices = @transform_1, window_bounds = array<i64: 4, 128>}, {pipeline_mode = #tpu.pipeline_mode<synchronous>, transform_indices = @transform_2, window_bounds = array<i64: 1, 128>}, {pipeline_mode = #tpu.pipeline_mode<synchronous>, transform_indices = @transform_3, window_bounds = array<i64: 1, 128>}, {transform_indices = @transform_4, window_bounds = array<i64: 4, 128>}]} {
    %c0 = arith.constant 0 : index
    %c0_0 = arith.constant 0 : index
    %0 = vector.load %arg1[%c0, %c0_0] : memref<4x4xf32, #tpu.memory_space<vmem>>, vector<4x4xf32>
    %c0_1 = arith.constant 0 : index
    %c0_2 = arith.constant 0 : index
    %1 = vector.load %arg2[%c0_1, %c0_2] : memref<4x128xf32, #tpu.memory_space<vmem>>, vector<4x128xf32>
    %cst = arith.constant dense<0.000000e+00> : vector<4x128xf32>
    %2 = tpu.matmul %0, %1, %cst {dimension_numbers = #tpu.dot_dimension_numbers<[1], [0], [0], [1], [0, 0, 1, 1], [], []>} : vector<4x4xf32>, vector<4x128xf32>, vector<4x128xf32> -> vector<4x128xf32>
    %c0_3 = arith.constant 0 : index
    %c0_4 = arith.constant 0 : index
    %3 = vector.load %arg3[%c0_3, %c0_4] : memref<1x128xf32, #tpu.memory_space<vmem>>, vector<1x128xf32>
    %4 = vector.broadcast %3 : vector<1x128xf32> to vector<4x128xf32>
    %5 = arith.mulf %2, %4 : vector<4x128xf32>
    %c0_5 = arith.constant 0 : index
    %c0_6 = arith.constant 0 : index
    %6 = vector.load %arg4[%c0_5, %c0_6] : memref<1x128xf32, #tpu.memory_space<vmem>>, vector<1x128xf32>
    %7 = vector.broadcast %6 : vector<1x128xf32> to vector<4x128xf32>
    %8 = arith.addf %5, %7 : vector<4x128xf32>
    %9 = math.sin %8 : vector<4x128xf32>
    %c0_7 = arith.constant 0 : index
    %c0_8 = arith.constant 0 : index
    %10 = vector.load %arg5[%c0_7, %c0_8] : memref<4x128xf32, #tpu.memory_space<vmem>>, vector<4x128xf32>
    tpu.vector_store %arg5[%c0_7, %c0_8], %9 {strides = array<i32>} : memref<4x128xf32, #tpu.memory_space<vmem>>, vector<4x128xf32>,
    return
  }
  func.func @transform_0(%arg0: i32) -> (i32, i32) {
    %c0_i32 = arith.constant 0 : i32
    %c0_i32_0 = arith.constant 0 : i32
    return %arg0, %c0_i32 : i32, i32
  }
  func.func @transform_1(%arg0: i32) -> (i32, i32) {
    %c0_i32 = arith.constant 0 : i32
    %c0_i32_0 = arith.constant 0 : i32
    %c0_i32_1 = arith.constant 0 : i32
    return %c0_i32, %c0_i32_0 : i32, i32
  }
  func.func @transform_2(%arg0: i32) -> (i32, i32) {
    %c0_i32 = arith.constant 0 : i32
    %c0_i32_0 = arith.constant 0 : i32
    %c0_i32_1 = arith.constant 0 : i32
    return %c0_i32, %c0_i32_0 : i32, i32
  }
  func.func @transform_3(%arg0: i32) -> (i32, i32) {
    %c0_i32 = arith.constant 0 : i32
    %c0_i32_0 = arith.constant 0 : i32
    %c0_i32_1 = arith.constant 0 : i32
    return %c0_i32, %c0_i32_0 : i32, i32
  }
  func.func @transform_4(%arg0: i32) -> (i32, i32) {
    %c0_i32 = arith.constant 0 : i32
    %c0_i32_0 = arith.constant 0 : i32
    return %arg0, %c0_i32 : i32, i32
  }
}

</mosaic_0001>

<llo_original>
// kernel: tpu_custom_call.1
$region0: #{tpu_custom_call.1}
  #allocation0 [shape = 'u32[]', space=smem, size = 0x4, offset = 0x4, fixed_abs, tag = 'smem constant byte address 0x4 - core index']
  #allocation1 [shape = 'u32[72,128]{1,0:T(1,128)}', space=vmem, size = 0x9000, scoped, tag = 'internal scratch']
  %s0 = inlined_call_operand.hbm [shape: f32[4,4], index: 0, kind: input, shape index: {}]
  %s1 = inlined_call_operand.hbm [shape: f32[4,128], index: 1, kind: input, shape index: {}]
  %s2 = inlined_call_operand.vmem [shape: f32[1,128], index: 2, kind: input, shape index: {}]
  %s3 = inlined_call_operand.vmem [shape: f32[1,128], index: 3, kind: input, shape index: {}]
  %s4 = inlined_call_operand.hbm [shape: f32[4,128], index: 4, kind: output, shape index: {}]
  %s5 = sld [smem:[#allocation0]]
  $region34: #{tpu_custom_call.1} parent=0
    _
  %s7 = ssub.s32 1, %s5
  %s8 = scalar_select 0, %s7, %s5
  $region1: #{tpu_custom_call.1} parent=0
    #allocation2 [shape = 'u8[2048]{0}', space=vmem, size = 0x800, scoped, tag = 'input window, operand 0, single buffered']
    #allocation3 [shape = 's32[1]{0}', space=sflag, size = 0x4, scoped, tag = 'scoped memory for tpu_custom_call.1']
    #allocation4 [shape = 's32[1]{0}', space=sflag, size = 0x4, scoped, tag = 'scoped memory for tpu_custom_call.1']
    #allocation5 [shape = 'u8[2048]{0}', space=vmem, size = 0x800, scoped, tag = 'input window, operand 1, single buffered']
    #allocation6 [shape = 's32[1]{0}', space=sflag, size = 0x4, scoped, tag = 'scoped memory for tpu_custom_call.1']
    #allocation7 [shape = 'u8[2048]{0}', space=vmem, size = 0x800, scoped, tag = 'output window, operand 0, single buffered']
    %9 = vsyncpa [#allocation3], 0
    %10 = vsyncpa [#allocation6], 0
    %11 = vsyncpa [#allocation4], 0
    // Predicated region
    $region2: #{tpu_custom_call.1} parent=1 // pred_check
      _
    $region3: #{tpu_custom_call.1} parent=1 // pred_check_branch
      %13 = sbr.rel (0) target = $region5
    $region4: #{tpu_custom_call.1} parent=1 // pred_region
      %15 = vsyncadd [#allocation3], 0
      %s17 = sshll.u32 %s0, 4
      %s18 = int_to_ptr.hbm [resolvable:$true] %s17
      %s19 = sshll.u32 [#allocation2], 4
      %s20 = int_to_ptr.vmem [resolvable:$true] %s19
      %22 = dma.hbm_to_vmem [thread:$0]  %s18, 64, %s20, [#allocation3]
    $region5: #{tpu_custom_call.1} parent=1 // pred_fallthru
      _
    // Predicated region
    $region6: #{tpu_custom_call.1} parent=1 // pred_check
      _
    $region7: #{tpu_custom_call.1} parent=1 // pred_check_branch
      %24 = sbr.rel (0) target = $region9
    $region8: #{tpu_custom_call.1} parent=1 // pred_region
      %26 = vsyncadd [#allocation6], 0
      %s28 = sshll.u32 %s1, 4
      %s29 = int_to_ptr.hbm [resolvable:$true] %s28
      %s30 = sshll.u32 [#allocation5], 4
      %s31 = int_to_ptr.vmem [resolvable:$true] %s30
      %33 = dma.hbm_to_vmem [thread:$0]  %s29, 64, %s31, [#allocation6]
    $region9: #{tpu_custom_call.1} parent=1 // pred_fallthru
      _
    // Predicated region
    $region10: #{tpu_custom_call.1} parent=1 // pred_check
      _
    $region11: #{tpu_custom_call.1} parent=1 // pred_check_branch
      %35 = sbr.rel (0) target = $region13
    $region12: #{tpu_custom_call.1} parent=1 // pred_region
      _
    $region13: #{tpu_custom_call.1} parent=1 // pred_fallthru
      _
    // Predicated region
    $region14: #{tpu_custom_call.1} parent=1 // pred_check
      _
    $region15: #{tpu_custom_call.1} parent=1 // pred_check_branch
      %37 = sbr.rel (0) target = $region17
    $region16: #{tpu_custom_call.1} parent=1 // pred_region
      _
    $region17: #{tpu_custom_call.1} parent=1 // pred_fallthru
      _
    // Predicated region
    $region18: #{tpu_custom_call.1} parent=1 // pred_check
      _
    $region19: #{tpu_custom_call.1} parent=1 // pred_check_branch
      %39 = sbr.rel (0) target = $region21
    $region20: #{tpu_custom_call.1} parent=1 // pred_region
      %41 = dma.done [#allocation3], 64
    $region21: #{tpu_custom_call.1} parent=1 // pred_fallthru
      _
    // Predicated region
    $region22: #{tpu_custom_call.1} parent=1 // pred_check
      _
    $region23: #{tpu_custom_call.1} parent=1 // pred_check_branch
      %43 = sbr.rel (0) target = $region25
    $region24: #{tpu_custom_call.1} parent=1 // pred_region
      %45 = dma.done [#allocation6], 64
    $region25: #{tpu_custom_call.1} parent=1 // pred_fallthru
      _
    %v46 = vld [vmem:[#allocation2] sm:$0xf]
    %v47 = vld [vmem:[#allocation5] sm:$0xf]
    %vm48 = vcmask 31744
    %v50 = vsel %vm48, %v46, 0
    %vm52 = vcmask 1043456
    %v54 = vsel %vm52, %v47, 0
    %56 = vmatpush.msra.mxu0 0.0
    %57 = vmatpush.msra.mxu0 0.0
    %58 = vmatpush.msra.mxu0 0.0
    %59 = vmatpush.msra.mxu0 0.0
    %60 = vmatpush.msra.mxu0 0.0
    %61 = vmatpush.msra.mxu0 0.0
    %62 = vmatpush.msra.mxu0 0.0
    %63 = vmatpush.msra.mxu0 0.0
    %64 = vmatpush.msra.mxu0 0.0
    %65 = vmatpush.msra.mxu0 0.0
    %66 = vmatpush.msra.mxu0 0.0
    %67 = vmatpush.msra.mxu0 0.0
    %68 = vmatpush.msra.mxu0 0.0
    %69 = vmatpush.msra.mxu0 0.0
    %70 = vmatpush.msra.mxu0 0.0
    %71 = vmatpush.msra.mxu0 %v54
    %72 = vmatmul.f32.gmra.mxu0 %v50
    %v73 = vpop.f32.mrf.mxu0
    %v74 = vadd.f32 0.0, %v73
    %75 = vdwg.mxu0
    %v76 = vld [vmem:[%s2] sm:$0x1]
    %v78 = vperm.slane %v76, 0
    %v80 = vmul.f32 %v74, %v78
    %v81 = vld [vmem:[%s3] sm:$0x1]
    %v83 = vperm.slane %v81, 0
    %v85 = vadd.f32 %v80, %v83
    %v86 = vand.u32 2147483647, %v85
    %vm87 = vcmp.le.f32.partialorder %v86, 0.7853982
    %vm88 = vcmp.lt.s32.totalorder %v85, 0
    %v89 = vand.u32 %v85, 2139095040
    %v90 = vshrl.u32 %v89, 23
    %v91 = vsub.s32 %v90, 127
    %v92 = vand.u32 2147483647, %v85
    %v93 = vand.u32 %v92, 8388607
    %v94 = vor.u32 %v93, 8388608
    %v95 = vsub.s32 0, %v94
    %v96 = vadd.s32 %v91, 1
    %vm97 = vcmp.gt.s32.totalorder %v96, 0
    %v98 = vsel %vm97, %v96, 0
    %v99 = vshrl.u32 %v98, 5
    %v100 = vand.u32 %v98, 31
    %v101 = vsub.s32 32, %v100
    %v102 = vshrl.u32 683565275, %v101
    %v103 = vshll.u32 683565275, %v100
    %v104 = vshrl.u32 2475754826, %v101
    %v105 = vor.u32 %v103, %v104
    %v106 = vshll.u32 2475754826, %v100
    %v107 = vshrl.u32 2131351028, %v101
    %v108 = vor.u32 %v106, %v107
    %v109 = vshll.u32 2131351028, %v100
    %v110 = vshrl.u32 2102212464, %v101
    %v111 = vor.u32 %v109, %v110
    %v112 = vshll.u32 2102212464, %v100
    %v113 = vshrl.u32 920167782, %v101
    %v114 = vor.u32 %v112, %v113
    %v115 = vshll.u32 920167782, %v100
    %v116 = vshrl.u32 1326507024, %v101
    %v117 = vor.u32 %v115, %v116
    %vm118 = vcmp.lt.s32.totalorder %v99, 1
    %vm119 = vcmp.lt.s32.totalorder %v99, 2
    %vm120 = vcmp.lt.s32.totalorder %v99, 3
    %vm121 = vcmp.lt.s32.totalorder %v99, 4
    %v122 = vsel %vm118, %v102, %v105
    %v123 = vsel %vm121, %v111, 2102212464
    %v124 = vsel %vm120, %v108, %v123
    %v125 = vsel %vm119, %v122, %v124
    %v126 = vsel %vm118, %v105, %v108
    %v127 = vsel %vm121, %v114, 920167782
    %v128 = vsel %vm120, %v111, %v127
    %v129 = vsel %vm119, %v126, %v128
    %v130 = vsel %vm118, %v108, %v111
    %v131 = vsel %vm121, %v117, 1326507024
    %v132 = vsel %vm120, %v114, %v131
    %v133 = vsel %vm119, %v130, %v132
    %v134 = vshll.u32 %v94, 8
    %v135 = vand.u32 %v134, 65535
    %v136 = vshrl.u32 %v134, 16
    %v137 = vand.u32 %v133, 65535
    %v138 = vshrl.u32 %v133, 16
    %v139 = vmul.u32 %v135, %v137
    %v140 = vmul.u32 %v135, %v138
    %v141 = vmul.u32 %v136, %v137
    %v142 = vmul.u32 %v136, %v138
    %v143 = vshll.u32 %v140, 16
    %v144 = vshrl.u32 %v140, 16
    %v145 = vshll.u32 %v141, 16
    %v146 = vshrl.u32 %v141, 16
    %vm147 = vc.u32 %v139, %v143
    %v148 = vsel %vm147, 1, 0
    %v149 = vadd.s32 %v139, %v143
    %v150 = vadd.s32 %v142, %v148
    %vm151 = vc.u32 %v149, %v145
    %v152 = vsel %vm151, 1, 0
    %v153 = vadd.s32 %v149, %v145
    %v154 = vadd.s32 %v150, %v152
    %v155 = vadd.s32 %v154, %v144
    %v156 = vadd.s32 %v155, %v146
    %v157 = vand.u32 %v134, 65535
    %v158 = vshrl.u32 %v134, 16
    %v159 = vand.u32 %v129, 65535
    %v160 = vshrl.u32 %v129, 16
    %v161 = vmul.u32 %v157, %v159
    %v162 = vmul.u32 %v157, %v160
    %v163 = vmul.u32 %v158, %v159
    %v164 = vmul.u32 %v158, %v160
    %v165 = vshll.u32 %v162, 16
    %v166 = vshrl.u32 %v162, 16
    %v167 = vshll.u32 %v163, 16
    %v168 = vshrl.u32 %v163, 16
    %vm169 = vc.u32 %v161, %v165
    %v170 = vsel %vm169, 1, 0
    %v171 = vadd.s32 %v161, %v165
    %v172 = vadd.s32 %v164, %v170
    %vm173 = vc.u32 %v171, %v167
    %v174 = vsel %vm173, 1, 0
    %v175 = vadd.s32 %v171, %v167
    %v176 = vadd.s32 %v172, %v174
    %v177 = vadd.s32 %v176, %v166
    %v178 = vadd.s32 %v177, %v168
    %v179 = vmul.u32 %v134, %v125
    %v180 = vadd.s32 %v156, %v175
    %vm181 = vc.u32 %v156, %v175
    %v182 = vadd.s32 %v178, 1
    %v183 = vsel %vm181, %v182, %v178
    %v184 = vadd.s32 %v179, %v183
    %v185 = vadd.s32 %v184, 536870912
    %v186 = vshrl.u32 %v185, 30
    %v187 = vshll.u32 %v186, 30
    %v188 = vsub.s32 %v184, %v187
    %vm189 = vcmp.lt.s32.totalorder %v188, 0
    %v190 = vsub.s32 0, %v188
    %v191 = vsel %vm189, %v190, %v188
    %v192 = vclz %v191
    %v193 = vsub.s32 %v192, 2
    %vm194 = vcmp.gt.s32.totalorder 0, %v193
    %v195 = vsel %vm194, 0, %v193
    %v196 = vsub.s32 32, %v195
    %v197 = vshll.u32 %v188, %v195
    %v198 = vshrl.u32 %v180, %v196
    %v199 = vor.u32 %v197, %v198
    %v200 = vsub.s32 4294967266, %v195
    %v201 = vadd.s32 %v200, 127
    %v202 = vshll.u32 %v201, 23
    %v203 = vor.u32 4788187, %v202
    %v204 = vand.u32 2147483647, %v203
    %v206 = vcvt.s32.f32 %v199
    %v207 = vmul.f32 %v206, %v204
    %v208 = vxor.u32 %v207, 2147483648
    %v209 = vsel %vm88, %v208, %v207
    %v210 = vsub.s32 4, %v186
    %v211 = vsel %vm88, %v210, %v186
    %v212 = vsel %vm87, %v85, %v209
    %v213 = vsel %vm87, 0, %v211
    %v214 = vmul.f32 %v212, %v212
    %v215 = vmul.f32 %v214, -0.001358992
    %v216 = vadd.f32 %v215, 0.041655596
    %v217 = vmul.f32 %v214, %v216
    %v218 = vadd.f32 %v217, -0.4999988
    %v219 = vmul.f32 %v214, %v218
    %v220 = vadd.f32 1.0, %v219
    %v221 = vmul.f32 %v212, %v212
    %v222 = vmul.f32 %v221, -0.00019511016
    %v223 = vadd.f32 %v222, 0.008332121
    %v224 = vmul.f32 %v221, %v223
    %v225 = vadd.f32 %v224, -0.16666654
    %v226 = vmul.f32 %v221, %v225
    %v227 = vadd.f32 %v226, 1.0
    %v228 = vmul.f32 %v227, %v212
    %vm229 = vweird.f32 %v85
    %v230 = vadd.s32 %v213, 3
    %v231 = vand.u32 %v230, 3
    %vm232 = vcmp.lt.s32.totalorder %v231, 2
    %vm233 = vcmp.eq.s32.totalorder %v231, 0
    %v234 = vxor.u32 %v228, 2147483648
    %v235 = vsel %vm233, %v220, %v234
    %vm236 = vcmp.eq.s32.totalorder %v231, 2
    %v237 = vxor.u32 %v220, 2147483648
    %v238 = vsel %vm236, %v237, %v228
    %v239 = vsel %vm232, %v235, %v238
    %v240 = vsel %vm229, nan, %v239
    %241 = vst [vmem:[#allocation7] sm:$0xf] %v240
    // Predicated region
    $region26: #{tpu_custom_call.1} parent=1 // pred_check
      _
    $region27: #{tpu_custom_call.1} parent=1 // pred_check_branch
      %243 = sbr.rel (0) target = $region29
    $region28: #{tpu_custom_call.1} parent=1 // pred_region
      %245 = vsyncadd [#allocation4], 0
      %s247 = sshll.u32 [#allocation7], 4
      %s248 = int_to_ptr.vmem [resolvable:$true] %s247
      %s249 = sshll.u32 %s4, 4
      %s250 = int_to_ptr.hbm [resolvable:$true] %s249
      %252 = dma.vmem_to_hbm [thread:$0]  %s248, 64, %s250, [#allocation4]
    $region29: #{tpu_custom_call.1} parent=1 // pred_fallthru
      _
    // Predicated region
    $region30: #{tpu_custom_call.1} parent=1 // pred_check
      _
    $region31: #{tpu_custom_call.1} parent=1 // pred_check_branch
      %254 = sbr.rel (0) target = $region33
    $region32: #{tpu_custom_call.1} parent=1 // pred_region
      %256 = dma.done [#allocation4], 64
    $region33: #{tpu_custom_call.1} parent=1 // pred_fallthru
      _
    %257 = vsyncpa [#allocation3], 1
    %258 = vsyncpa [#allocation6], 1
    %259 = vsyncpa [#allocation4], 1

</llo_original>
